<compile_context>
chip_gen: v7x
topology: tpu7x:2x2x1
jax: 0.10.0
libtpu: 0.0.40
codegen_flags: <defaults>
</compile_context>

<pallas_src>
import functools
import math

import jax
import jax.numpy as jnp
from jax.experimental import pallas as pl
from jax.experimental.pallas import tpu as pltpu


def _gate_conv_kernel(x_ref, w_ref, b_ref, o_ref, xpad_ref, *,
                      H, W, KH, KW, P, Cin, Cout, THW, use_bf16):
    # x_ref   : (1, Cin, H*W)        full image for this batch element (f32)
    # w_ref   : (2*Cout, KH*KW*Cin)  tap-major / channel-minor weight matrix
    # b_ref   : (2*Cout, 1)          bias
    # o_ref   : (1, Cout, THW)       lane-dense output block
    # xpad_ref: (Cin, H*W + 2*PADW)  flat zero-padded image (VMEM scratch)
    r = pl.program_id(1)
    HW = H * W
    PADW = P * (W + 1)  # flat halo: P rows plus P columns worth of zeros

    # Build the flat zero-padded image once per batch element.  The spatial
    # grid axis is "arbitrary", so this scratch persists across its steps.
    @pl.when(r == 0)
    def _():
        zeros = jnp.zeros((Cin, PADW), dtype=xpad_ref.dtype)
        xpad_ref[:, :PADW] = zeros
        xpad_ref[:, PADW + HW:] = zeros
        xpad_ref[:, PADW:PADW + HW] = x_ref[0]

    # Window of flat positions needed by this spatial block (plus halo).
    win_start = r * THW
    if THW % 128 == 0:
        win_start = pl.multiple_of(win_start, 128)
    win = xpad_ref[:, pl.ds(win_start, THW + 2 * PADW)]       # (Cin, THW+2*PADW)

    # Output-column index of each lane (blocks cover whole rows: THW % W == 0).
    col = jax.lax.broadcasted_iota(jnp.int32, (Cin, THW), 1) % W

    # Gather the KH*KW shifted taps as static lane-offset slices of `win` and
    # stack them along the contraction dim.  In the flat layout a horizontal
    # out-of-image read wraps into the neighbouring row, so mask those columns.
    taps = []
    for kh in range(KH):
        for kw in range(KW):
            t = win[:, kh * W + kw: kh * W + kw + THW]        # (Cin, THW)
            dx = kw - P
            if dx < 0:
                t = jnp.where(col < -dx, 0.0, t)
            elif dx > 0:
                t = jnp.where(col >= W - dx, 0.0, t)
            taps.append(t)
    patch = jnp.concatenate(taps, axis=0)                     # (KH*KW*Cin, THW)
    if use_bf16:
        patch = patch.astype(jnp.bfloat16)

    # Single fused MXU matmul, f32 accumulation.
    acc = jnp.dot(w_ref[...], patch, preferred_element_type=jnp.float32)
    acc = acc + b_ref[...].astype(jnp.float32)                # (2*Cout, THW)

    xs = acc[:Cout, :]
    g = acc[Cout:, :]
    o_ref[0] = (xs * jax.nn.sigmoid(g)).astype(o_ref.dtype)   # lane-dense store


def _pick_spatial_block(H, W):
    """Pick a flat spatial tile: multiple of W (whole rows) and of 128 lanes."""
    hw = H * W
    base = (W * 128) // math.gcd(W, 128)   # lcm(W, 128)
    if hw % base != 0:
        return hw, 1                        # fallback: one block per image
    nr = min(8, hw // base)
    while (hw // base) % nr:
        nr -= 1
    return hw // nr, nr


def gate_conv(x_nchw, weight_oihw, bias, *, kernel_size=3, stride=1, padding=1,
              use_bf16=False):
    """GateConv forward.  x_nchw: (B, Cin, H, W); weight: (2*Cout, Cin, KH, KW)."""
    B, Cin, H, W = x_nchw.shape
    two_cout, Cin_w, KH, KW = weight_oihw.shape
    assert stride == 1, "only stride=1 implemented"
    assert KH == kernel_size and KW == kernel_size and Cin_w == Cin
    assert kernel_size % 2 == 1 and 2 * padding == kernel_size - 1, (
        "same-spatial conv required (padding == (kernel_size - 1) // 2)")
    Cout = two_cout // 2
    HW = H * W
    P = padding
    PADW = P * (W + 1)

    # Metadata-only reshape: NCHW is already (B, Cin, H*W) contiguous in HBM.
    x_flat = x_nchw.reshape(B, Cin, HW)
    # Tiny weight repack: column index = (kh*KW + kw)*Cin + c (matches kernel).
    w_mat = jnp.transpose(weight_oihw, (0, 2, 3, 1)).reshape(two_cout, KH * KW * Cin)
    if use_bf16:
        w_mat = w_mat.astype(jnp.bfloat16)
    b2 = bias.reshape(two_cout, 1).astype(jnp.float32)

    THW, NR = _pick_spatial_block(H, W)

    kernel = functools.partial(
        _gate_conv_kernel, H=H, W=W, KH=KH, KW=KW, P=P,
        Cin=Cin, Cout=Cout, THW=THW, use_bf16=use_bf16)

    out_flat = pl.pallas_call(
        kernel,
        out_shape=jax.ShapeDtypeStruct((B, Cout, HW), x_nchw.dtype),
        grid_spec=pltpu.PrefetchScalarGridSpec(
            num_scalar_prefetch=0,
            grid=(B, NR),
            in_specs=[
                # Constant block index along r -> the image is DMA'd once per b.
                pl.BlockSpec((1, Cin, HW), lambda b, r: (b, 0, 0)),
                pl.BlockSpec((two_cout, KH * KW * Cin), lambda b, r: (0, 0)),
                pl.BlockSpec((two_cout, 1), lambda b, r: (0, 0)),
            ],
            out_specs=pl.BlockSpec((1, Cout, THW), lambda b, r: (b, 0, r)),
            scratch_shapes=[pltpu.VMEM((Cin, HW + 2 * PADW), x_nchw.dtype)],
        ),
        compiler_params=pltpu.CompilerParams(
            dimension_semantics=("parallel", "arbitrary"),
        ),
    )(x_flat, w_mat, b2)

    # Metadata-only reshape back to NCHW.
    return out_flat.reshape(B, Cout, H, W)


def _reference_gate_conv(x_nchw, weight_oihw, bias, padding=1):
    """Pure-JAX reference matching the PyTorch module."""
    y = jax.lax.conv_general_dilated(
        x_nchw, weight_oihw,
        window_strides=(1, 1),
        padding=((padding, padding), (padding, padding)),
        dimension_numbers=("NCHW", "OIHW", "NCHW"),
    ) + bias.reshape(1, -1, 1, 1)
    cout = weight_oihw.shape[0] // 2
    xs, g = y[:, :cout], y[:, cout:]
    return xs * jax.nn.sigmoid(g)


if __name__ == "__main__":
    # Small shapes consistent with the module (non-transpose branch).
    B, Cin, Cout, H, W = 2, 4, 8, 16, 16
    K = 3

    key = jax.random.PRNGKey(0)
    kx, kwt, kb = jax.random.split(key, 3)

    x = jax.random.normal(kx, (B, Cin, H, W), dtype=jnp.float32)
    # PyTorch Conv2d weight shape: (out_channels*2, in_channels, KH, KW).
    fan_in = Cin * K * K
    bound = 1.0 / (fan_in ** 0.5)
    weight = jax.random.uniform(
        kwt, (2 * Cout, Cin, K, K), minval=-bound, maxval=bound, dtype=jnp.float32)
    bias = jax.random.uniform(
        kb, (2 * Cout,), minval=-bound, maxval=bound, dtype=jnp.float32)

    ref = _reference_gate_conv(x, weight, bias, padding=1)

    # Exact-semantics (f32 MXU) path.
    out = gate_conv(x, weight, bias, kernel_size=K, stride=1, padding=1)
    out = jax.block_until_ready(out)
    assert out.shape == (B, Cout, H, W), out.shape
    assert jnp.allclose(out, ref, atol=1e-5, rtol=1e-5), (
        float(jnp.max(jnp.abs(out - ref))))

    # bf16-operand MXU fast path (v6e/v7x); f32 accumulation -> loose tolerance.
    out_bf16 = jax.block_until_ready(
        gate_conv(x, weight, bias, kernel_size=K, stride=1, padding=1,
                  use_bf16=True))
    assert jnp.allclose(out_bf16, ref, atol=7.5e-2, rtol=7.5e-2), (
        float(jnp.max(jnp.abs(out_bf16 - ref))))

    print("KERNEL_OK")
</pallas_src>

<mosaic_0001>
module attributes {stable_mosaic.version = 11 : i64} {
  func.func @_gate_conv_kernel(%arg0: i32, %arg1: i32, %arg2: memref<1x4x256xf32, #tpu.memory_space<vmem>>, %arg3: memref<16x36xf32, #tpu.memory_space<vmem>>, %arg4: memref<16x1xf32, #tpu.memory_space<vmem>>, %arg5: memref<1x8x128xf32, #tpu.memory_space<vmem>>, %arg6: memref<4x290xf32, #tpu.memory_space<vmem>>) attributes {dimension_semantics = [#tpu.dimension_semantics<parallel>, #tpu.dimension_semantics<arbitrary>], iteration_bounds = array<i64: 2, 2>, scalar_prefetch = 0 : i64, scratch_operands = 1 : i64, tpu.core_type = #tpu.core_type<tc>, window_params = [{transform_indices = @transform_0, window_bounds = array<i64: 1, 4, 256>}, {pipeline_mode = #tpu.pipeline_mode<synchronous>, transform_indices = @transform_1, window_bounds = array<i64: 16, 36>}, {pipeline_mode = #tpu.pipeline_mode<synchronous>, transform_indices = @transform_2, window_bounds = array<i64: 16, 1>}, {transform_indices = @transform_3, window_bounds = array<i64: 1, 8, 128>}]} {
    %c0_i32 = arith.constant 0 : i32
    %0 = arith.cmpi eq, %arg1, %c0_i32 : i32
    %1 = arith.extui %0 : i1 to i32
    %c0_i32_0 = arith.constant 0 : i32
    %2 = arith.cmpi ne, %1, %c0_i32_0 : i32
    scf.if %2 {
      %cst_24 = arith.constant 0.000000e+00 : f32
      %74 = vector.broadcast %cst_24 : f32 to vector<4x17xf32>
      %c0_25 = arith.constant 0 : index
      %c0_26 = arith.constant 0 : index
      %75 = vector.load %arg6[%c0_25, %c0_26] : memref<4x290xf32, #tpu.memory_space<vmem>>, vector<4x17xf32>
      tpu.vector_store %arg6[%c0_25, %c0_26], %74 {strides = array<i32>} : memref<4x290xf32, #tpu.memory_space<vmem>>, vector<4x17xf32>,
      %c0_27 = arith.constant 0 : index
      %c273 = arith.constant 273 : index
      %76 = vector.load %arg6[%c0_27, %c273] : memref<4x290xf32, #tpu.memory_space<vmem>>, vector<4x17xf32>
      tpu.vector_store %arg6[%c0_27, %c273], %74 {strides = array<i32>} : memref<4x290xf32, #tpu.memory_space<vmem>>, vector<4x17xf32>,
      %c0_28 = arith.constant 0 : index
      %c0_29 = arith.constant 0 : index
      %c0_30 = arith.constant 0 : index
      %77 = vector.load %arg2[%c0_28, %c0_29, %c0_30] : memref<1x4x256xf32, #tpu.memory_space<vmem>>, vector<1x4x256xf32>
      %78 = vector.shape_cast %77 : vector<1x4x256xf32> to vector<4x256xf32>
      %c0_31 = arith.constant 0 : index
      %c17 = arith.constant 17 : index
      %79 = vector.load %arg6[%c0_31, %c17] : memref<4x290xf32, #tpu.memory_space<vmem>>, vector<4x256xf32>
      tpu.vector_store %arg6[%c0_31, %c17], %78 {strides = array<i32>} : memref<4x290xf32, #tpu.memory_space<vmem>>, vector<4x256xf32>,
    } else {
    }
    %c128_i32 = arith.constant 128 : i32
    %3 = arith.muli %arg1, %c128_i32 : i32
    %4 = tpu.assume_multiple %3, 128 : i32
    %c0 = arith.constant 0 : index
    %5 = arith.index_cast %4 : i32 to index
    %6 = vector.load %arg6[%c0, %5] : memref<4x290xf32, #tpu.memory_space<vmem>>, vector<4x162xf32>
    %7 = tpu.iota {dimensions = array<i32: 1>} : vector<4x128xi32>
    %c16_i32 = arith.constant 16 : i32
    %c0_i32_1 = arith.constant 0 : i32
    %8 = arith.cmpi eq, %c16_i32, %c0_i32_1 : i32
    %c1_i32 = arith.constant 1 : i32
    %9 = arith.select %8, %c1_i32, %c16_i32 : i32
    %10 = vector.broadcast %9 : i32 to vector<4x128xi32>
    %11 = arith.remsi %7, %10 : vector<4x128xi32>
    %c0_i32_2 = arith.constant 0 : i32
    %12 = vector.broadcast %c0_i32_2 : i32 to vector<4x128xi32>
    %13 = arith.cmpi ne, %11, %12 : vector<4x128xi32>
    %c0_i32_3 = arith.constant 0 : i32
    %14 = vector.broadcast %c0_i32_3 : i32 to vector<4x128xi32>
    %15 = arith.cmpi slt, %11, %14 : vector<4x128xi32>
    %c0_i32_4 = arith.constant 0 : i32
    %16 = arith.cmpi slt, %9, %c0_i32_4 : i32
    %17 = vector.broadcast %16 : i1 to vector<4x128xi1>
    %18 = vector.broadcast %17 : vector<4x128xi1> to vector<4x128xi1>
    %19 = arith.xori %15, %18 : vector<4x128xi1>
    %20 = arith.andi %19, %13 : vector<4x128xi1>
    %21 = vector.broadcast %9 : i32 to vector<4x128xi32>
    %22 = arith.addi %11, %21 : vector<4x128xi32>
    %23 = arith.select %20, %22, %11 : vector<4x128xi1>, vector<4x128xi32>
    %24 = vector.extract_strided_slice %6 {offsets = [0, 0], sizes = [4, 128], strides = [1, 1]} : vector<4x162xf32> to vector<4x128xf32>
    %c1_i32_5 = arith.constant 1 : i32
    %25 = vector.broadcast %c1_i32_5 : i32 to vector<4x128xi32>
    %26 = arith.cmpi slt, %23, %25 : vector<4x128xi32>
    %cst = arith.constant 0.000000e+00 : f32
    %27 = vector.broadcast %cst : f32 to vector<4x128xf32>
    %28 = arith.select %26, %27, %24 : vector<4x128xi1>, vector<4x128xf32>
    %29 = vector.extract_strided_slice %6 {offsets = [0, 1], sizes = [4, 128], strides = [1, 1]} : vector<4x162xf32> to vector<4x128xf32>
    %30 = vector.extract_strided_slice %6 {offsets = [0, 2], sizes = [4, 128], strides = [1, 1]} : vector<4x162xf32> to vector<4x128xf32>
    %c15_i32 = arith.constant 15 : i32
    %31 = vector.broadcast %c15_i32 : i32 to vector<4x128xi32>
    %32 = arith.cmpi sge, %23, %31 : vector<4x128xi32>
    %cst_6 = arith.constant 0.000000e+00 : f32
    %33 = vector.broadcast %cst_6 : f32 to vector<4x128xf32>
    %34 = arith.select %32, %33, %30 : vector<4x128xi1>, vector<4x128xf32>
    %35 = vector.extract_strided_slice %6 {offsets = [0, 16], sizes = [4, 128], strides = [1, 1]} : vector<4x162xf32> to vector<4x128xf32>
    %c1_i32_7 = arith.constant 1 : i32
    %36 = vector.broadcast %c1_i32_7 : i32 to vector<4x128xi32>
    %37 = arith.cmpi slt, %23, %36 : vector<4x128xi32>
    %cst_8 = arith.constant 0.000000e+00 : f32
    %38 = vector.broadcast %cst_8 : f32 to vector<4x128xf32>
    %39 = arith.select %37, %38, %35 : vector<4x128xi1>, vector<4x128xf32>
    %40 = vector.extract_strided_slice %6 {offsets = [0, 17], sizes = [4, 128], strides = [1, 1]} : vector<4x162xf32> to vector<4x128xf32>
    %41 = vector.extract_strided_slice %6 {offsets = [0, 18], sizes = [4, 128], strides = [1, 1]} : vector<4x162xf32> to vector<4x128xf32>
    %c15_i32_9 = arith.constant 15 : i32
    %42 = vector.broadcast %c15_i32_9 : i32 to vector<4x128xi32>
    %43 = arith.cmpi sge, %23, %42 : vector<4x128xi32>
    %cst_10 = arith.constant 0.000000e+00 : f32
    %44 = vector.broadcast %cst_10 : f32 to vector<4x128xf32>
    %45 = arith.select %43, %44, %41 : vector<4x128xi1>, vector<4x128xf32>
    %46 = vector.extract_strided_slice %6 {offsets = [0, 32], sizes = [4, 128], strides = [1, 1]} : vector<4x162xf32> to vector<4x128xf32>
    %c1_i32_11 = arith.constant 1 : i32
    %47 = vector.broadcast %c1_i32_11 : i32 to vector<4x128xi32>
    %48 = arith.cmpi slt, %23, %47 : vector<4x128xi32>
    %cst_12 = arith.constant 0.000000e+00 : f32
    %49 = vector.broadcast %cst_12 : f32 to vector<4x128xf32>
    %50 = arith.select %48, %49, %46 : vector<4x128xi1>, vector<4x128xf32>
    %51 = vector.extract_strided_slice %6 {offsets = [0, 33], sizes = [4, 128], strides = [1, 1]} : vector<4x162xf32> to vector<4x128xf32>
    %52 = vector.extract_strided_slice %6 {offsets = [0, 34], sizes = [4, 128], strides = [1, 1]} : vector<4x162xf32> to vector<4x128xf32>
    %c15_i32_13 = arith.constant 15 : i32
    %53 = vector.broadcast %c15_i32_13 : i32 to vector<4x128xi32>
    %54 = arith.cmpi sge, %23, %53 : vector<4x128xi32>
    %cst_14 = arith.constant 0.000000e+00 : f32
    %55 = vector.broadcast %cst_14 : f32 to vector<4x128xf32>
    %56 = arith.select %54, %55, %52 : vector<4x128xi1>, vector<4x128xf32>
    %57 = tpu.concatenate %28, %29, %34, %39, %40, %45, %50, %51, %56 in 0 : vector<4x128xf32>, vector<4x128xf32>, vector<4x128xf32>, vector<4x128xf32>, vector<4x128xf32>, vector<4x128xf32>, vector<4x128xf32>, vector<4x128xf32>, vector<4x128xf32> -> vector<36x128xf32>
    %c0_15 = arith.constant 0 : index
    %c0_16 = arith.constant 0 : index
    %58 = vector.load %arg3[%c0_15, %c0_16] : memref<16x36xf32, #tpu.memory_space<vmem>>, vector<16x36xf32>
    %cst_17 = arith.constant dense<0.000000e+00> : vector<16x128xf32>
    %59 = tpu.matmul %58, %57, %cst_17 {dimension_numbers = #tpu.dot_dimension_numbers<[1], [0], [0], [1], [0, 0, 1, 1], [], []>} : vector<16x36xf32>, vector<36x128xf32>, vector<16x128xf32> -> vector<16x128xf32>
    %c0_18 = arith.constant 0 : index
    %c0_19 = arith.constant 0 : index
    %60 = vector.load %arg4[%c0_18, %c0_19] : memref<16x1xf32, #tpu.memory_space<vmem>>, vector<16x1xf32>
    %61 = vector.broadcast %60 : vector<16x1xf32> to vector<16x128xf32>
    %62 = arith.addf %59, %61 : vector<16x128xf32>
    %63 = vector.extract_strided_slice %62 {offsets = [0, 0], sizes = [8, 128], strides = [1, 1]} : vector<16x128xf32> to vector<8x128xf32>
    %64 = vector.extract_strided_slice %62 {offsets = [8, 0], sizes = [8, 128], strides = [1, 1]} : vector<16x128xf32> to vector<8x128xf32>
    %65 = arith.negf %64 : vector<8x128xf32>
    %66 = math.exp %65 : vector<8x128xf32>
    %cst_20 = arith.constant 1.000000e+00 : f32
    %67 = vector.broadcast %cst_20 : f32 to vector<8x128xf32>
    %68 = arith.addf %67, %66 : vector<8x128xf32>
    %69 = arith.divf %67, %68 : vector<8x128xf32>
    %70 = arith.mulf %63, %69 : vector<8x128xf32>
    %c0_21 = arith.constant 0 : index
    %c0_22 = arith.constant 0 : index
    %c0_23 = arith.constant 0 : index
    %71 = vector.load %arg5[%c0_21, %c0_22, %c0_23] : memref<1x8x128xf32, #tpu.memory_space<vmem>>, vector<1x8x128xf32>
    %72 = vector.shape_cast %71 : vector<1x8x128xf32> to vector<8x128xf32>
    %73 = vector.shape_cast %70 : vector<8x128xf32> to vector<1x8x128xf32>
    tpu.vector_store %arg5[%c0_21, %c0_22, %c0_23], %73 {strides = array<i32>} : memref<1x8x128xf32, #tpu.memory_space<vmem>>, vector<1x8x128xf32>,
    return
  }
  func.func @transform_0(%arg0: i32, %arg1: i32) -> (i32, i32, i32) {
    %c0_i32 = arith.constant 0 : i32
    %c0_i32_0 = arith.constant 0 : i32
    %c0_i32_1 = arith.constant 0 : i32
    return %arg0, %c0_i32, %c0_i32_0 : i32, i32, i32
  }
  func.func @transform_1(%arg0: i32, %arg1: i32) -> (i32, i32) {
    %c0_i32 = arith.constant 0 : i32
    %c0_i32_0 = arith.constant 0 : i32
    %c0_i32_1 = arith.constant 0 : i32
    return %c0_i32, %c0_i32_0 : i32, i32
  }
  func.func @transform_2(%arg0: i32, %arg1: i32) -> (i32, i32) {
    %c0_i32 = arith.constant 0 : i32
    %c0_i32_0 = arith.constant 0 : i32
    %c0_i32_1 = arith.constant 0 : i32
    return %c0_i32, %c0_i32_0 : i32, i32
  }
  func.func @transform_3(%arg0: i32, %arg1: i32) -> (i32, i32, i32) {
    %c0_i32 = arith.constant 0 : i32
    %c0_i32_0 = arith.constant 0 : i32
    return %arg0, %c0_i32, %arg1 : i32, i32, i32
  }
}

</mosaic_0001>

<llo_original>
// kernel: tpu_custom_call.1
$region0: #{tpu_custom_call.1}
  #allocation0 [shape = 'u32[]', space=smem, size = 0x4, offset = 0x4, fixed_abs, tag = 'smem constant byte address 0x4 - core index']
  #allocation1 [shape = 'u32[144,128]{1,0:T(1,128)}', space=vmem, size = 0x12000, scoped, tag = 'internal scratch']
  #allocation2 [shape = 'f32[4,290]{1,0:T(4,128)}', space=vmem, size = 0x1800, scoped, tag = 'scratch operand']
  %s0 = inlined_call_operand.vmem [shape: f32[2,4,256], index: 0, kind: input, shape index: {}]
  %s1 = inlined_call_operand.hbm [shape: f32[16,36], index: 1, kind: input, shape index: {}]
  %s2 = inlined_call_operand.vmem [shape: f32[16,1], index: 2, kind: input, shape index: {}]
  %s3 = inlined_call_operand.hbm [shape: f32[2,8,256], index: 3, kind: output, shape index: {}]
  %s4 = sld [smem:[#allocation0]]
  $region53: #{tpu_custom_call.1} parent=0
    _
  %s6 = ssub.s32 1, %s4
  %s7 = scalar_select 0, %s6, %s4
  $region1: #{tpu_custom_call.1} parent=0
    #allocation3 [shape = 'u8[8192]{0}', space=vmem, size = 0x2000, scoped, tag = 'input window, operand 1, single buffered']
    #allocation4 [shape = 's32[2]{0}', space=sflag, size = 0x8, scoped, tag = 'scoped memory for tpu_custom_call.1']
    #allocation5 [shape = 's32[2]{0}', space=sflag, size = 0x8, scoped, tag = 'scoped memory for tpu_custom_call.1']
    #allocation6 [shape = 'u8[8192]{0}', space=vmem, size = 0x2000, scoped, tag = 'output window, operand 0']
    %8 = vsyncpa [#allocation4], 0
    %9 = vsyncpa [#allocation5], 0
    %s10 = scalar_lea.sflag [#allocation5], 1
    %11 = vsyncpa %s10, 0
    loop: start=0, step=1, limit=6
    $region2: #{tpu_custom_call.1} parent=1 // loop_pre_header
      _
    $region3: #{tpu_custom_call.1} parent=1 // loop_header
      %s13 = sphi 0, %s17
      %p14 = scmp.ge.s32.totalorder %s13, 6
      %s20 = sphi 0, %s32
      %s21 = sphi 0, %s28
      %s22 = sphi 0, %s20
      %s23 = sphi 0, %s21
      %s24 = sphi 0, %s22
      %s25 = sphi 0, %s23
      %s35 = sphi 0, %s37
      %s38 = sphi 0, %s35
      %s39 = sphi 0, %s38
      %s55 = sphi 0, %s39
      %s59 = sphi 0, %s59
      %s61 = sphi 0, %s59
      %s62 = sphi 0, %s61
      %s76 = sphi 0, %s62
      %s80 = sphi 0, %s80
      %s82 = sphi 0, %s80
      %s83 = sphi 0, %s82
      %s97 = sphi 0, %s83
      %s105 = sphi 0, %s107
      %s108 = sphi 0, %s105
      %s109 = sphi 0, %s108
      %s125 = sphi 0, %s109
    $region4: #{tpu_custom_call.1} parent=1 // loop_header_branch
      %16 = sbr.rel (%p14) target = $region8
    $region5: #{tpu_custom_call.1} parent=1 // loop_body
      %s18 = ssub.s32 %s13, 1
      %s19 = ssub.s32 %s13, 2
      %s26 = sadd.s32 1, %s21
      %p27 = scmp.ge.s32.totalorder %s26, 2
      %s28 = scalar_select %p27, 0, %s26
      %s29 = sadd.s32 1, %s20
      %s30 = scalar_select %p27, %s29, %s20
      %p31 = scmp.ge.s32.totalorder %s30, 2
      %s32 = scalar_select %p31, 0, %s30
      %s33 = ssub.s32 %s20, %s32
      %p34 = scmp.eq.s32.totalorder %s33, 0
      %s36 = sadd.s32 %s35, 1
      %s37 = scalar_select %p34, %s35, %s36
      %p40 = pneg %p34
      %p41 = scmp.eq.s32.totalorder %s13, 3
      %p42 = por %p40, %p41
      %p43 = scmp.ne.s32.totalorder %s35, %s38
      %p44 = scmp.eq.s32.totalorder %s13, 0
      %p45 = por %p43, %p44
      %p46 = scmp.ne.s32.totalorder %s35, %s38
      %p47 = scmp.eq.s32.totalorder %s18, 3
      %p48 = por %p46, %p47
      %p49 = scmp.ne.s32.totalorder %s38, %s39
      %p50 = scmp.eq.s32.totalorder %s18, 0
      %p51 = por %p49, %p50
      %p52 = scmp.ne.s32.totalorder %s38, %s39
      %p53 = scmp.eq.s32.totalorder %s19, 3
      %p54 = por %p52, %p53
      %p56 = scmp.ne.s32.totalorder %s39, %s55
      %p57 = scmp.eq.s32.totalorder %s19, 0
      %p58 = por %p56, %p57
      %s60 = sadd.s32 %s59, 1
      %p63 = scmp.eq.s32.totalorder %s13, 3
      %p64 = scmp.ne.s32.totalorder %s59, %s61
      %p65 = scmp.eq.s32.totalorder %s13, 0
      %p66 = por %p64, %p65
      %p67 = scmp.ne.s32.totalorder %s59, %s61
      %p68 = scmp.eq.s32.totalorder %s18, 3
      %p69 = por %p67, %p68
      %p70 = scmp.ne.s32.totalorder %s61, %s62
      %p71 = scmp.eq.s32.totalorder %s18, 0
      %p72 = por %p70, %p71
      %p73 = scmp.ne.s32.totalorder %s61, %s62
      %p74 = scmp.eq.s32.totalorder %s19, 3
      %p75 = por %p73, %p74
      %p77 = scmp.ne.s32.totalorder %s62, %s76
      %p78 = scmp.eq.s32.totalorder %s19, 0
      %p79 = por %p77, %p78
      %s81 = sadd.s32 %s80, 1
      %p84 = scmp.eq.s32.totalorder %s13, 3
      %p85 = scmp.ne.s32.totalorder %s80, %s82
      %p86 = scmp.eq.s32.totalorder %s13, 0
      %p87 = por %p85, %p86
      %p88 = scmp.ne.s32.totalorder %s80, %s82
      %p89 = scmp.eq.s32.totalorder %s18, 3
      %p90 = por %p88, %p89
      %p91 = scmp.ne.s32.totalorder %s82, %s83
      %p92 = scmp.eq.s32.totalorder %s18, 0
      %p93 = por %p91, %p92
      %p94 = scmp.ne.s32.totalorder %s82, %s83
      %p95 = scmp.eq.s32.totalorder %s19, 3
      %p96 = por %p94, %p95
      %p98 = scmp.ne.s32.totalorder %s83, %s97
      %p99 = scmp.eq.s32.totalorder %s19, 0
      %p100 = por %p98, %p99
      %s101 = ssub.s32 %s20, %s32
      %s102 = ssub.s32 %s21, %s28
      %s103 = sor.u32 %s101, %s102
      %p104 = scmp.eq.s32.totalorder %s103, 0
      %s106 = sadd.s32 %s105, 1
      %s107 = scalar_select %p104, %s105, %s106
      %p110 = pneg %p104
      %p111 = scmp.eq.s32.totalorder %s13, 3
      %p112 = por %p110, %p111
      %p113 = scmp.ne.s32.totalorder %s105, %s108
      %p114 = scmp.eq.s32.totalorder %s13, 0
      %p115 = por %p113, %p114
      %p116 = scmp.ne.s32.totalorder %s105, %s108
      %p117 = scmp.eq.s32.totalorder %s18, 3
      %p118 = por %p116, %p117
      %p119 = scmp.ne.s32.totalorder %s108, %s109
      %p120 = scmp.eq.s32.totalorder %s18, 0
      %p121 = por %p119, %p120
      %p122 = scmp.ne.s32.totalorder %s108, %s109
      %p123 = scmp.eq.s32.totalorder %s19, 3
      %p124 = por %p122, %p123
      %p126 = scmp.ne.s32.totalorder %s109, %s125
      %p127 = scmp.eq.s32.totalorder %s19, 0
      %p128 = por %p126, %p127
      %p129 = scmp.le.s32.totalorder 1, %s13
      %p130 = scmp.lt.s32.totalorder %s13, 5
      %p131 = pnand %p129, %p130
      %p132 = pneg %p131
      // Predicated region
      $region9: #{tpu_custom_call.1} parent=5 // pred_check
        _
      $region10: #{tpu_custom_call.1} parent=5 // pred_check_branch
        %134 = sbr.rel (%p131) target = $region12
      $region11: #{tpu_custom_call.1} parent=5 // pred_region
        %s135 = ssub.s32 %s13, 1
        // Predicated region
        $region13: #{tpu_custom_call.1} parent=11 // pred_check
          %p136 = pneg %p72
        $region14: #{tpu_custom_call.1} parent=11 // pred_check_branch
          %138 = sbr.rel (%p136) target = $region16
        $region15: #{tpu_custom_call.1} parent=11 // pred_region
          %s140 = ssub.s32 256, 256
          %141 = vsyncadd [#allocation4], %s140
          %s142 = sshll.u32 [#allocation3], 4
          %s143 = int_to_ptr.vmem [resolvable:$true] %s142
          %148 = dma.hbm_to_vmem [thread:$0]  %s1, 256, %s143, [#allocation4], 128, 128, 8
        $region16: #{tpu_custom_call.1} parent=11 // pred_fallthru
          _
        // Predicated region
        $region17: #{tpu_custom_call.1} parent=11 // pred_check
          %p149 = pneg %p93
        $region18: #{tpu_custom_call.1} parent=11 // pred_check_branch
          %151 = sbr.rel (%p149) target = $region20
        $region19: #{tpu_custom_call.1} parent=11 // pred_region
          _
        $region20: #{tpu_custom_call.1} parent=11 // pred_fallthru
          _
      $region12: #{tpu_custom_call.1} parent=5 // pred_fallthru
        _
      %p152 = scmp.lt.s32.totalorder %s13, 4
      // Predicated region
      $region21: #{tpu_custom_call.1} parent=5 // pred_check
        %p153 = pneg %p152
      $region22: #{tpu_custom_call.1} parent=5 // pred_check_branch
        %155 = sbr.rel (%p153) target = $region24
      $region23: #{tpu_custom_call.1} parent=5 // pred_region
        // Predicated region
        $region25: #{tpu_custom_call.1} parent=23 // pred_check
          %p156 = pneg %p45
        $region26: #{tpu_custom_call.1} parent=23 // pred_check_branch
          %158 = sbr.rel (%p156) target = $region28
        $region27: #{tpu_custom_call.1} parent=23 // pred_region
          %p159 = scmp.lt.s32.totalorder %s20, 1
          %s160 = scalar_select %p159, %s20, 1
          %s161 = smul.addr %s160, 2
          %s162 = smul.addr %s161, 4
          %s163 = scalar_lea.vmem %s0, %s162
        $region28: #{tpu_custom_call.1} parent=23 // pred_fallthru
          _
      $region24: #{tpu_custom_call.1} parent=5 // pred_fallthru
        _
      %p164 = scmp.le.s32.totalorder 1, %s13
      %p165 = scmp.lt.s32.totalorder %s13, 5
      %p166 = pnand %p164, %p165
      %p167 = pneg %p166
      // Predicated region
      $region29: #{tpu_custom_call.1} parent=5 // pred_check
        _
      $region30: #{tpu_custom_call.1} parent=5 // pred_check_branch
        %169 = sbr.rel (%p166) target = $region32
      $region31: #{tpu_custom_call.1} parent=5 // pred_region
        %s170 = ssub.s32 %s13, 1
        // Predicated region
        $region33: #{tpu_custom_call.1} parent=31 // pred_check
          %p171 = pneg %p72
        $region34: #{tpu_custom_call.1} parent=31 // pred_check_branch
          %173 = sbr.rel (%p171) target = $region36
        $region35: #{tpu_custom_call.1} parent=31 // pred_region
          %174 = dma.done [#allocation4], 256
        $region36: #{tpu_custom_call.1} parent=31 // pred_fallthru
          _
        %p175 = scmp.lt.s32.totalorder %s22, 1
        %s176 = scalar_select %p175, %s22, 1
        %s177 = smul.addr %s176, 2
        %s178 = smul.addr %s177, 4
        %s179 = scalar_lea.vmem %s0, %s178
        %p180 = pneg %p51
        %p181 = pneg %p48
        %p182 = pneg %p72
        %p183 = pneg %p69
        %p184 = pneg %p93
        %p185 = pneg %p90
        %p186 = pneg %p121
        %p187 = pneg %p118
        %s188 = sand.u32 %s108, 1
        %s189 = scalar_lea.sflag [#allocation5], %s188
        %s190 = sand.u32 %s108, 1
        %s191 = smul.addr %s190, 8
        %s192 = scalar_lea.vmem [#allocation6], %s191
        %p193 = scmp.lt.s32.totalorder %s22, 1
        %s194 = scalar_select %p193, %s22, 1
        %s195 = smul.addr %s194, 2
        %s196 = smul.addr %s195, 4
        %s197 = scalar_lea.vmem %s0, %s196
        %p198 = scmp.eq.s32.totalorder %s23, 0
        // Predicated region
        $region37: #{tpu_custom_call.1} parent=31 // pred_check
          %p199 = pneg %p198
        $region38: #{tpu_custom_call.1} parent=31 // pred_check_branch
          %201 = sbr.rel (%p199) target = $region40
        $region39: #{tpu_custom_call.1} parent=31 // pred_region
          %vm202 = vcmask 134144
          %203 = vst.msk [vmem:[#allocation2] sm:$0xf] %vm202, 0.0
          %vm204 = vcmask 273544
          %205 = vst.msk [vmem:[#allocation2 + $0x8] sm:$0xf] %vm204, 0.0
          %v206 = vld [vmem:[%s197] sm:$0xff]
          %208 = vrot.lane.b32.xlu0 %v206, 17
          %v209 = vpop.permute.xlu0 %208
          %v210 = vrot.slane %v209, 4
          %vm211 = vcmask 138240
          %v212 = vsel %vm211, %v210, %v209
          %vm215 = vcmask 1043592
          %vm216 = vcmask 1047556
          %vm217 = vmor %vm216, %vm215
          %218 = vst.msk [vmem:[#allocation2] sm:$0xff] %vm217, %v212
          %219 = vst.msk [vmem:[#allocation2 + $0x8] sm:$0xf] %vm202, %v210
        $region40: #{tpu_custom_call.1} parent=31 // pred_fallthru
          _
        %s220 = smul.u32 %s23, 128
        %s221 = sshra.s32 %s220, 7
        %s222 = sand.u32 %s220, 127
        %s223 = smul.addr %s221, 4
        %s224 = scalar_lea.vmem [#allocation2], %s223
        %v225 = vld [vmem:[%s224] sm:$0xff]
        %v226 = vlaneseq
        %v227 = vand.u32 %v226, 127
        %vm228 = vcmp.lt.s32.totalorder %v227, 0
        %v229 = vsub.s32 0, %v227
        %v230 = vsel %vm228, %v229, %v227
        %v231 = vshrl.u32 %v230, 4
        %v232 = vand.u32 %v230, 15
        %v233 = vsub.s32 0, %v232
        %v234 = vsel %vm228, %v233, %v232
        %vm235 = vcmp.ne.s32.totalorder %v234, 0
        %vm236 = vcmp.lt.s32.totalorder %v234, 0
        %vm237 = vmand %vm236, %vm235
        %v238 = vadd.s32 %v234, 16
        %v239 = vsel %vm237, %v238, %v234
        %vm240 = vcmp.lt.s32.totalorder %v239, 1
        %v241 = vsel %vm240, 0.0, %v225
        %vm242 = vcmp.ge.s32.totalorder %v239, 15
        %v244 = vcombine.high %v225, %v225
        %245 = vrot.lane.b32.xlu0 %v225, 126
        %v246 = vpop.permute.xlu0 %245
        %247 = vrot.lane.b32.xlu0 %v244, 126
        %v248 = vpop.permute.xlu0 %247
        %vm249 = vcmask 1031168
        %v250 = vsel %vm249, %v246, %v248
        %v252 = vsel %vm242, 0.0, %v250
        %253 = vrot.lane.b32.xlu0 %v225, 112
        %v254 = vpop.permute.xlu0 %253
        %255 = vrot.lane.b32.xlu0 %v244, 112
        %v256 = vpop.permute.xlu0 %255
        %vm257 = vcmask 916480
        %v258 = vsel %vm257, %v254, %v256
        %v260 = vsel %vm240, 0.0, %v258
        %261 = vrot.lane.b32.xlu0 %v225, 110
        %v262 = vpop.permute.xlu0 %261
        %263 = vrot.lane.b32.xlu0 %v244, 110
        %v264 = vpop.permute.xlu0 %263
        %vm265 = vcmask 900096
        %v266 = vsel %vm265, %v262, %v264
        %v268 = vsel %vm242, 0.0, %v266
        %269 = vrot.lane.b32.xlu0 %v225, 96
        %v270 = vpop.permute.xlu0 %269
        %271 = vrot.lane.b32.xlu0 %v244, 96
        %v272 = vpop.permute.xlu0 %271
        %vm273 = vcmask 785408
        %v274 = vsel %vm273, %v270, %v272
        %v276 = vsel %vm240, 0.0, %v274
        %277 = vrot.lane.b32.xlu0 %v225, 94
        %v278 = vpop.permute.xlu0 %277
        %279 = vrot.lane.b32.xlu0 %v244, 94
        %v280 = vpop.permute.xlu0 %279
        %vm281 = vcmask 769024
        %v282 = vsel %vm281, %v278, %v280
        %v284 = vsel %vm242, 0.0, %v282
        %v285 = vcombine.low %v225, %v225
        %286 = vrot.lane.b32.xlu0 %v285, 127
        %v287 = vpop.permute.xlu0 %286
        %288 = vrot.lane.b32.xlu0 %v225, 127
        %v289 = vpop.permute.xlu0 %288
        %vm290 = vcmask 1039360
        %v291 = vsel %vm290, %v287, %v289
        %v294 = vrot.slane %v260, 4
        %296 = vrot.lane.b32.xlu0 %v225, 111
        %v297 = vpop.permute.xlu0 %296
        %298 = vrot.lane.b32.xlu0 %v244, 111
        %v299 = vpop.permute.xlu0 %298
        %vm300 = vcmask 908288
        %v301 = vsel %vm300, %v297, %v299
        %v304 = vrot.slane %v268, 4
        %306 = vrot.lane.b32.xlu0 %v285, 95
        %v307 = vpop.permute.xlu0 %306
        %308 = vrot.lane.b32.xlu0 %v225, 95
        %v309 = vpop.permute.xlu0 %308
        %vm310 = vcmask 777216
        %v311 = vsel %vm310, %v307, %v309
        %vm313 = vcmask 1043456
        %v314 = vsel %vm313, %v241, %v291
        %v315 = vsel %vm313, %v252, %v294
        %v316 = vsel %vm313, %v301, %v304
        %v317 = vsel %vm313, %v276, %v311
        %v318 = vld [vmem:[#allocation3] sm:$0xff]
        %v319 = vld [vmem:[#allocation3 + $0x8] sm:$0xff]
        %v320 = vld [vmem:[%s2] sm:$0xff]
        %v321 = vld [vmem:[%s2 + $0x8] sm:$0xff]
        %323 = vset.pattern.permute.xlu0 0
        %324 = vperm.xlu0 %323, %v320
        %v325 = vpop.permute.xlu0 %324
        %328 = vset.pattern.permute.xlu0 0
        %329 = vperm.xlu0 %328, %v321
        %v330 = vpop.permute.xlu0 %329
        %vm332 = vcmask 293888
        %v334 = vsel %vm332, %v318, 0
        %v337 = vsel %vm332, %v319, 0
        %v340 = vsel %vm313, %v284, 0
        %342 = vmatprep.subr.mxu0 0.0
        %343 = vmatpush1.msra.mxu0 %v314
        %344 = vmatprep.subr.mxu0 0.0
        %345 = vmatpush1.msra.mxu0 %v315
        %346 = vmatprep.subr.mxu0 0.0
        %347 = vmatpush1.msra.mxu0 %v316
        %348 = vmatprep.subr.mxu0 0.0
        %349 = vmatpush1.msra.mxu0 %v317
        %350 = vmatprep.subr.mxu0 0.0
        %351 = vmatpush1.msra.mxu0 %v340
        %352 = vmatprep.subr.mxu0 0.0
        %353 = vmatpush1.msra.mxu0 0.0
        %354 = vmatprep.subr.mxu0 0.0
        %355 = vmatpush1.msra.mxu0 0.0
        %356 = vmatprep.subr.mxu0 0.0
        %357 = vmatpush1.msra.mxu0 0.0
        %358 = vmatprep.subr.mxu0 0.0
        %359 = vmatpush1.msra.mxu0 0.0
        %360 = vmatprep.subr.mxu0 0.0
        %361 = vmatpush1.msra.mxu0 0.0
        %362 = vmatprep.subr.mxu0 0.0
        %363 = vmatpush1.msra.mxu0 0.0
        %364 = vmatprep.subr.mxu0 0.0
        %365 = vmatpush1.msra.mxu0 0.0
        %366 = vmatprep.subr.mxu0 0.0
        %367 = vmatpush1.msra.mxu0 0.0
        %368 = vmatprep.subr.mxu0 0.0
        %369 = vmatpush1.msra.mxu0 0.0
        %370 = vmatprep.subr.mxu0 0.0
        %371 = vmatpush1.msra.mxu0 0.0
        %372 = vmatprep.subr.mxu0 0.0
        %373 = vmatpush1.msra.mxu0 0.0
        %374 = vmatprep.subr.mxu0 0.0
        %375 = vmatpush1.msra.mxu0 0.0
        %376 = vmatprep.subr.mxu0 0.0
        %377 = vmatpush1.msra.mxu0 0.0
        %378 = vmatprep.subr.mxu0 0.0
        %379 = vmatpush1.msra.mxu0 0.0
        %380 = vmatprep.subr.mxu0 0.0
        %381 = vmatpush1.msra.mxu0 0.0
        %382 = vmatprep.subr.mxu0 0.0
        %383 = vmatpush1.msra.mxu0 0.0
        %384 = vmatprep.subr.mxu0 0.0
        %385 = vmatpush1.msra.mxu0 0.0
        %386 = vmatprep.subr.mxu0 0.0
        %387 = vmatpush1.msra.mxu0 0.0
        %388 = vmatprep.subr.mxu0 0.0
        %389 = vmatpush1.msra.mxu0 0.0
        %390 = vmatprep.subr.mxu0 0.0
        %391 = vmatpush1.msra.mxu0 0.0
        %392 = vmatprep.subr.mxu0 0.0
        %393 = vmatpush1.msra.mxu0 0.0
        %394 = vmatprep.subr.mxu0 0.0
        %395 = vmatpush1.msra.mxu0 0.0
        %396 = vmatprep.subr.mxu0 0.0
        %397 = vmatpush1.msra.mxu0 0.0
        %398 = vmatprep.subr.mxu0 0.0
        %399 = vmatpush1.msra.mxu0 0.0
        %400 = vmatprep.subr.mxu0 0.0
        %401 = vmatpush1.msra.mxu0 0.0
        %402 = vmatprep.subr.mxu0 0.0
        %403 = vmatpush1.msra.mxu0 0.0
        %404 = vmatprep.subr.mxu0 0.0
        %405 = vmatpush1.msra.mxu0 0.0
        %406 = vmatprep.mubr.f32.mxu0 0.0
        %407 = vmatmul.mubr.f32.gmra.mrb[0].mxu0 %v334
        %v408 = vpop.f32.mrb[0].mxu0
        %v409 = vadd.f32 %v325, %v408
        %v410 = vpop.f32.mrb[0].mxu0
        %411 = vmatprep.mubr.f32.mxu0 0.0
        %412 = vmatmul.mubr.f32.gmra.mrb[0].mxu0 %v337
        %v413 = vpop.f32.mrb[0].mxu0
        %v414 = vadd.f32 %v330, %v413
        %v415 = vpop.f32.mrb[0].mxu0
        %416 = vdwg.mxu0
        %v417 = vxor.u32 %v414, 2147483648
        %v418 = vmul.f32 %v417, 1.442695
        %v419 = vpow.pop %v418
        %v420 = vadd.f32 %v419, 1.0
        %v421 = vrcp.pop %v420
        %v422 = vmul.f32 1.0, %v421
        %v423 = vmul.f32 %v409, %v422
        %424 = vst [vmem:[%s192] sm:$0xff] %v423
        %s425 = sand.u32 %s108, 1
        %s426 = scalar_lea.sflag [#allocation5], %s425
        %s427 = sand.u32 %s108, 1
        %s428 = smul.addr %s427, 8
        %s429 = scalar_lea.vmem [#allocation6], %s428
        // Predicated region
        $region41: #{tpu_custom_call.1} parent=31 // pred_check
          %p430 = pneg %p118
        $region42: #{tpu_custom_call.1} parent=31 // pred_check_branch
          %432 = sbr.rel (%p430) target = $region44
        $region43: #{tpu_custom_call.1} parent=31 // pred_region
          %s434 = ssub.s32 128, 128
          %435 = vsyncadd %s426, %s434
          %s436 = smul.addr %s22, 2
          %s437 = sadd.s32 %s23, %s436
          %s438 = smul.addr %s437, 128
          %s439 = scalar_lea.hbm %s3, %s438
          %s441 = sshll.u32 %s429, 4
          %s442 = int_to_ptr.vmem [resolvable:$true] %s441
          %444 = dma.vmem_to_hbm [thread:$0]  %s442, 128, %s439, %s426
        $region44: #{tpu_custom_call.1} parent=31 // pred_fallthru
          _
      $region32: #{tpu_custom_call.1} parent=5 // pred_fallthru
        _
      %p445 = scmp.le.s32.totalorder 2, %s13
      // Predicated region
      $region45: #{tpu_custom_call.1} parent=5 // pred_check
        %p446 = pneg %p445
      $region46: #{tpu_custom_call.1} parent=5 // pred_check_branch
        %448 = sbr.rel (%p446) target = $region48
      $region47: #{tpu_custom_call.1} parent=5 // pred_region
        %s449 = ssub.s32 %s13, 2
        // Predicated region
        $region49: #{tpu_custom_call.1} parent=47 // pred_check
          %p450 = pneg %p124
        $region50: #{tpu_custom_call.1} parent=47 // pred_check_branch
          %452 = sbr.rel (%p450) target = $region52
        $region51: #{tpu_custom_call.1} parent=47 // pred_region
          %s453 = sand.u32 %s109, 1
          %s454 = scalar_lea.sflag [#allocation5], %s453
          %s455 = sand.u32 %s109, 1
          %s456 = smul.addr %s455, 8
          %s457 = scalar_lea.vmem [#allocation6], %s456
          %458 = dma.done %s454, 128
        $region52: #{tpu_custom_call.1} parent=47 // pred_fallthru
          _
      $region48: #{tpu_custom_call.1} parent=5 // pred_fallthru
        _
    $region6: #{tpu_custom_call.1} parent=1 // loop_footer
      %s17 = sadd.s32 1, %s13
    $region7: #{tpu_custom_call.1} parent=1 // loop_footer_branch
      %12 = sbr.rel target = $region3
    $region8: #{tpu_custom_call.1} parent=1 // loop_exit
      _
    %459 = vsyncpa [#allocation4], 1
    %s460 = scalar_lea.sflag [#allocation4], 1
    %461 = vsyncpa %s460, 1
    %462 = vsyncpa [#allocation5], 1
    %s463 = scalar_lea.sflag [#allocation5], 1
    %464 = vsyncpa %s463, 1

</llo_original>
